<compile_context>
chip_gen: v5e
topology: v5e:2x2
jax: 0.10.0
libtpu: 0.0.40
codegen_flags: <defaults>
</compile_context>

<pallas_src>
import math

import jax
import jax.numpy as jnp
from jax import lax
from jax.experimental import pallas as pl
from jax.experimental.pallas import tpu as pltpu


def mha_kernel(q_ref, k_ref, v_ref, bias_ref,
               wq_ref, bq_ref, wk_ref, bk_ref, wv_ref, bv_ref,
               wo_ref, bo_ref,
               out_ref, acc_ref):
    """One (batch, query-tile, head) grid step.

    q_ref    : (1, TQ, dim)      query tile           (activation dtype)
    k_ref    : (1, S,  dim)      full keys            (activation dtype)
    v_ref    : (1, S,  dim)      full values          (activation dtype)
    bias_ref : (1, 1, S)         additive key-padding bias (0 / -1e30), f32
    wq/wk/wv : (1, dim, dph)     this head's projection weights (scale folded in wq)
    bq/bk/bv : (1, 1, dph)       this head's projection biases, f32
    wo_ref   : (1, dph, dim)     this head's rows of the output projection
    bo_ref   : (1, dim)          output bias, f32
    out_ref  : (1, TQ, dim)      output tile (revisited across the head axis)
    acc_ref  : (TQ, dim) f32     VMEM accumulator over heads
    """
    h = pl.program_id(2)
    n_h = pl.num_programs(2)

    q_in = q_ref[0]            # (TQ, dim)
    k_in = k_ref[0]            # (S,  dim)
    v_in = v_ref[0]            # (S,  dim)
    bias = bias_ref[0]         # (1,  S)

    # Per-head projections; 1/sqrt(dph) is pre-folded into wq/bq by the wrapper.
    # Operands stay in their input dtype; accumulation is f32 on the MXU.
    qh = jnp.dot(q_in, wq_ref[0], preferred_element_type=jnp.float32) + bq_ref[0]  # (TQ, dph)
    kh = jnp.dot(k_in, wk_ref[0], preferred_element_type=jnp.float32) + bk_ref[0]  # (S,  dph)
    vh = jnp.dot(v_in, wv_ref[0], preferred_element_type=jnp.float32) + bv_ref[0]  # (S,  dph)

    # Scores: contract on the last axis of both operands (no K transpose).
    s = lax.dot_general(qh, kh, (((1,), (1,)), ((), ())),
                        preferred_element_type=jnp.float32)        # (TQ, S)
    s = s + bias                                                   # additive -1e30 mask

    # Numerically-stable softmax; reciprocal on the EUP instead of a VALU divide.
    m = jnp.max(s, axis=-1, keepdims=True)
    e = jnp.exp(s - m)
    p = e * pl.reciprocal(jnp.sum(e, axis=-1, keepdims=True), approx=True)
    # dropout: identity (eval mode)
    # TODO(synk): attn_mask multiply and output_attentions path skipped
    #             (attn_mask=None, output_attentions=False in the default forward).

    ctx = jnp.dot(p, vh, preferred_element_type=jnp.float32)        # (TQ, dph)

    # Partial output projection for this head; summing over heads equals
    # concat(ctx_heads) @ Wo.
    part = jnp.dot(ctx, wo_ref[0], preferred_element_type=jnp.float32)  # (TQ, dim)

    @pl.when(h == 0)
    def _():
        acc_ref[...] = jnp.zeros_like(acc_ref)

    acc_ref[...] += part

    @pl.when(h == n_h - 1)
    def _():
        out_ref[0] = (acc_ref[...] + bo_ref[...]).astype(out_ref.dtype)


def _pick_q_tile(seq):
    # 256-wide query tiles feed v6e/v7x's 256-wide MXU; fall back to 128 (v5e
    # sweet spot), else take the full sequence as one tile.
    for t in (256, 128):
        if seq % t == 0:
            return t
    return seq


def _prep_params(params, n_heads, dtype):
    """Pre-transpose to (in, out), split per head, fold 1/sqrt(dph) into Wq/bq."""
    dim = params["wq"].shape[0]
    dph = dim // n_heads
    scale = 1.0 / math.sqrt(dph)

    def split_out_heads(w_t):  # (dim_in, dim_out) -> (H, dim_in, dph)
        return jnp.transpose(w_t.reshape(dim, n_heads, dph), (1, 0, 2))

    wq_h = split_out_heads(params["wq"].T * scale).astype(dtype)
    wk_h = split_out_heads(params["wk"].T).astype(dtype)
    wv_h = split_out_heads(params["wv"].T).astype(dtype)
    wo_h = params["wo"].T.reshape(n_heads, dph, dim).astype(dtype)   # rows split by head

    bq_h = (params["bq"] * scale).reshape(n_heads, 1, dph).astype(jnp.float32)
    bk_h = params["bk"].reshape(n_heads, 1, dph).astype(jnp.float32)
    bv_h = params["bv"].reshape(n_heads, 1, dph).astype(jnp.float32)
    bo = params["bo"].reshape(1, dim).astype(jnp.float32)

    return wq_h, bq_h, wk_h, bk_h, wv_h, bv_h, wo_h, bo


def multihead_attention(query, key, value, key_padding_mask, params, n_heads):
    bs, seq, dim = query.shape
    assert dim % n_heads == 0
    dph = dim // n_heads
    dtype = query.dtype

    # Additive key-padding bias: 0 for valid keys, -1e30 (finite, avoids
    # -inf - (-inf) = NaN) for padded keys.
    bias = jnp.where(key_padding_mask, 0.0, -1e30).astype(jnp.float32).reshape(bs, 1, seq)

    wq_h, bq_h, wk_h, bk_h, wv_h, bv_h, wo_h, bo = _prep_params(params, n_heads, dtype)

    tq = _pick_q_tile(seq)
    n_q = seq // tq
    grid = (bs, n_q, n_heads)   # heads innermost: output accumulated across them

    q_spec = pl.BlockSpec((1, tq, dim), lambda b, qi, h: (b, qi, 0))
    kv_spec = pl.BlockSpec((1, seq, dim), lambda b, qi, h: (b, 0, 0))
    bias_spec = pl.BlockSpec((1, 1, seq), lambda b, qi, h: (b, 0, 0))
    w_spec = pl.BlockSpec((1, dim, dph), lambda b, qi, h: (h, 0, 0))
    pb_spec = pl.BlockSpec((1, 1, dph), lambda b, qi, h: (h, 0, 0))
    wo_spec = pl.BlockSpec((1, dph, dim), lambda b, qi, h: (h, 0, 0))
    bo_spec = pl.BlockSpec((1, dim), lambda b, qi, h: (0, 0))
    out_spec = pl.BlockSpec((1, tq, dim), lambda b, qi, h: (b, qi, 0))

    return pl.pallas_call(
        mha_kernel,
        out_shape=jax.ShapeDtypeStruct((bs, seq, dim), dtype),
        grid=grid,
        in_specs=[q_spec, kv_spec, kv_spec, bias_spec,
                  w_spec, pb_spec, w_spec, pb_spec, w_spec, pb_spec,
                  wo_spec, bo_spec],
        out_specs=out_spec,
        scratch_shapes=[pltpu.VMEM((tq, dim), jnp.float32)],
        compiler_params=pltpu.CompilerParams(
            dimension_semantics=("parallel", "parallel", "arbitrary"),
            vmem_limit_bytes=32 * 1024 * 1024,   # explicit budget; safe on v5e/v6e/v7x
        ),
    )(query, key, value, bias,
      wq_h, bq_h, wk_h, bk_h, wv_h, bv_h, wo_h, bo)


def reference_mha(query, key, value, key_padding_mask, params, n_heads):
    """Pure-JAX reference mirroring the PyTorch forward (dropout in eval mode)."""
    bs, seq, dim = query.shape
    dph = dim // n_heads

    def lin(x, w, b):
        return x @ w.T + b

    def shape(x):
        return x.reshape(bs, seq, n_heads, dph).transpose(0, 2, 1, 3)

    q = shape(lin(query, params["wq"], params["bq"])) / math.sqrt(dph)
    k = shape(lin(key, params["wk"], params["bk"]))
    v = shape(lin(value, params["wv"], params["bv"]))

    scores = jnp.einsum("bhqd,bhkd->bhqk", q, k)
    valid = key_padding_mask[:, None, None, :]          # True = valid key
    scores = jnp.where(valid, scores, -jnp.inf)
    weights = jax.nn.softmax(scores, axis=-1)
    ctx = jnp.einsum("bhqk,bhkd->bhqd", weights, v)
    ctx = ctx.transpose(0, 2, 1, 3).reshape(bs, seq, dim)
    return lin(ctx, params["wo"], params["bo"])


def init_params(rng, dim):
    keys = jax.random.split(rng, 8)
    bound = 1.0 / math.sqrt(dim)

    def u(k, shape):
        return jax.random.uniform(k, shape, jnp.float32, -bound, bound)

    return {
        "wq": u(keys[0], (dim, dim)), "bq": u(keys[1], (dim,)),
        "wk": u(keys[2], (dim, dim)), "bk": u(keys[3], (dim,)),
        "wv": u(keys[4], (dim, dim)), "bv": u(keys[5], (dim,)),
        "wo": u(keys[6], (dim, dim)), "bo": u(keys[7], (dim,)),
    }


if __name__ == "__main__":
    bs, seq, dim, n_heads = 2, 8, 32, 4

    root = jax.random.PRNGKey(0)
    k_params, k_q, k_k, k_v = jax.random.split(root, 4)

    params = init_params(k_params, dim)
    query = jax.random.normal(k_q, (bs, seq, dim), jnp.float32)
    key = jax.random.normal(k_k, (bs, seq, dim), jnp.float32)
    value = jax.random.normal(k_v, (bs, seq, dim), jnp.float32)

    # key_padding_mask: True = valid key, False = padded (module masks `~mask` with -inf)
    key_padding_mask = jnp.array(
        [[True] * seq,
         [True] * (seq - 3) + [False] * 3],
        dtype=jnp.bool_,
    )

    out = multihead_attention(query, key, value, key_padding_mask, params, n_heads)
    out = jax.block_until_ready(out)

    ref = reference_mha(query, key, value, key_padding_mask, params, n_heads)
    assert out.shape == (bs, seq, dim)
    # Tolerance is loosened slightly (vs 1e-5) because the softmax normalizer uses
    # the EUP's approximate reciprocal (~1e-4-level relative error); real bugs
    # would produce errors orders of magnitude larger.
    assert jnp.allclose(out, ref, atol=5e-3, rtol=5e-3), \
        f"max abs err {jnp.max(jnp.abs(out - ref))}"

    print("KERNEL_OK")
</pallas_src>

<mosaic_0001>
module attributes {stable_mosaic.version = 11 : i64} {
  func.func @mha_kernel(%arg0: i32, %arg1: i32, %arg2: i32, %arg3: memref<1x8x32xf32, #tpu.memory_space<vmem>>, %arg4: memref<1x8x32xf32, #tpu.memory_space<vmem>>, %arg5: memref<1x8x32xf32, #tpu.memory_space<vmem>>, %arg6: memref<1x1x8xf32, #tpu.memory_space<vmem>>, %arg7: memref<1x32x8xf32, #tpu.memory_space<vmem>>, %arg8: memref<1x1x8xf32, #tpu.memory_space<vmem>>, %arg9: memref<1x32x8xf32, #tpu.memory_space<vmem>>, %arg10: memref<1x1x8xf32, #tpu.memory_space<vmem>>, %arg11: memref<1x32x8xf32, #tpu.memory_space<vmem>>, %arg12: memref<1x1x8xf32, #tpu.memory_space<vmem>>, %arg13: memref<1x8x32xf32, #tpu.memory_space<vmem>>, %arg14: memref<1x32xf32, #tpu.memory_space<vmem>>, %arg15: memref<1x8x32xf32, #tpu.memory_space<vmem>>, %arg16: memref<8x32xf32, #tpu.memory_space<vmem>>) attributes {dimension_semantics = [#tpu.dimension_semantics<parallel>, #tpu.dimension_semantics<parallel>, #tpu.dimension_semantics<arbitrary>], iteration_bounds = array<i64: 2, 1, 4>, scalar_prefetch = 0 : i64, scratch_operands = 1 : i64, tpu.core_type = #tpu.core_type<tc>, window_params = [{transform_indices = @transform_0, window_bounds = array<i64: 1, 8, 32>}, {transform_indices = @transform_1, window_bounds = array<i64: 1, 8, 32>}, {transform_indices = @transform_2, window_bounds = array<i64: 1, 8, 32>}, {transform_indices = @transform_3, window_bounds = array<i64: 1, 1, 8>}, {transform_indices = @transform_4, window_bounds = array<i64: 1, 32, 8>}, {transform_indices = @transform_5, window_bounds = array<i64: 1, 1, 8>}, {transform_indices = @transform_6, window_bounds = array<i64: 1, 32, 8>}, {transform_indices = @transform_7, window_bounds = array<i64: 1, 1, 8>}, {transform_indices = @transform_8, window_bounds = array<i64: 1, 32, 8>}, {transform_indices = @transform_9, window_bounds = array<i64: 1, 1, 8>}, {transform_indices = @transform_10, window_bounds = array<i64: 1, 8, 32>}, {pipeline_mode = #tpu.pipeline_mode<synchronous>, transform_indices = @transform_11, window_bounds = array<i64: 1, 32>}, {transform_indices = @transform_12, window_bounds = array<i64: 1, 8, 32>}]} {
    %c0 = arith.constant 0 : index
    %c0_0 = arith.constant 0 : index
    %c0_1 = arith.constant 0 : index
    %0 = vector.load %arg3[%c0, %c0_0, %c0_1] : memref<1x8x32xf32, #tpu.memory_space<vmem>>, vector<1x8x32xf32>
    %1 = vector.shape_cast %0 : vector<1x8x32xf32> to vector<8x32xf32>
    %c0_2 = arith.constant 0 : index
    %c0_3 = arith.constant 0 : index
    %c0_4 = arith.constant 0 : index
    %2 = vector.load %arg4[%c0_2, %c0_3, %c0_4] : memref<1x8x32xf32, #tpu.memory_space<vmem>>, vector<1x8x32xf32>
    %3 = vector.shape_cast %2 : vector<1x8x32xf32> to vector<8x32xf32>
    %c0_5 = arith.constant 0 : index
    %c0_6 = arith.constant 0 : index
    %c0_7 = arith.constant 0 : index
    %4 = vector.load %arg5[%c0_5, %c0_6, %c0_7] : memref<1x8x32xf32, #tpu.memory_space<vmem>>, vector<1x8x32xf32>
    %5 = vector.shape_cast %4 : vector<1x8x32xf32> to vector<8x32xf32>
    %c0_8 = arith.constant 0 : index
    %c0_9 = arith.constant 0 : index
    %c0_10 = arith.constant 0 : index
    %6 = vector.load %arg6[%c0_8, %c0_9, %c0_10] : memref<1x1x8xf32, #tpu.memory_space<vmem>>, vector<1x1x8xf32>
    %7 = vector.shape_cast %6 : vector<1x1x8xf32> to vector<1x8xf32>
    %c0_11 = arith.constant 0 : index
    %c0_12 = arith.constant 0 : index
    %c0_13 = arith.constant 0 : index
    %8 = vector.load %arg7[%c0_11, %c0_12, %c0_13] : memref<1x32x8xf32, #tpu.memory_space<vmem>>, vector<1x32x8xf32>
    %9 = vector.shape_cast %8 : vector<1x32x8xf32> to vector<32x8xf32>
    %cst = arith.constant dense<0.000000e+00> : vector<8x8xf32>
    %10 = tpu.matmul %1, %9, %cst {dimension_numbers = #tpu.dot_dimension_numbers<[1], [0], [0], [1], [0, 0, 1, 1], [], []>} : vector<8x32xf32>, vector<32x8xf32>, vector<8x8xf32> -> vector<8x8xf32>
    %c0_14 = arith.constant 0 : index
    %c0_15 = arith.constant 0 : index
    %c0_16 = arith.constant 0 : index
    %11 = vector.load %arg8[%c0_14, %c0_15, %c0_16] : memref<1x1x8xf32, #tpu.memory_space<vmem>>, vector<1x1x8xf32>
    %12 = vector.shape_cast %11 : vector<1x1x8xf32> to vector<1x8xf32>
    %13 = vector.broadcast %12 : vector<1x8xf32> to vector<8x8xf32>
    %14 = arith.addf %10, %13 : vector<8x8xf32>
    %c0_17 = arith.constant 0 : index
    %c0_18 = arith.constant 0 : index
    %c0_19 = arith.constant 0 : index
    %15 = vector.load %arg9[%c0_17, %c0_18, %c0_19] : memref<1x32x8xf32, #tpu.memory_space<vmem>>, vector<1x32x8xf32>
    %16 = vector.shape_cast %15 : vector<1x32x8xf32> to vector<32x8xf32>
    %cst_20 = arith.constant dense<0.000000e+00> : vector<8x8xf32>
    %17 = tpu.matmul %3, %16, %cst_20 {dimension_numbers = #tpu.dot_dimension_numbers<[1], [0], [0], [1], [0, 0, 1, 1], [], []>} : vector<8x32xf32>, vector<32x8xf32>, vector<8x8xf32> -> vector<8x8xf32>
    %c0_21 = arith.constant 0 : index
    %c0_22 = arith.constant 0 : index
    %c0_23 = arith.constant 0 : index
    %18 = vector.load %arg10[%c0_21, %c0_22, %c0_23] : memref<1x1x8xf32, #tpu.memory_space<vmem>>, vector<1x1x8xf32>
    %19 = vector.shape_cast %18 : vector<1x1x8xf32> to vector<1x8xf32>
    %20 = vector.broadcast %19 : vector<1x8xf32> to vector<8x8xf32>
    %21 = arith.addf %17, %20 : vector<8x8xf32>
    %c0_24 = arith.constant 0 : index
    %c0_25 = arith.constant 0 : index
    %c0_26 = arith.constant 0 : index
    %22 = vector.load %arg11[%c0_24, %c0_25, %c0_26] : memref<1x32x8xf32, #tpu.memory_space<vmem>>, vector<1x32x8xf32>
    %23 = vector.shape_cast %22 : vector<1x32x8xf32> to vector<32x8xf32>
    %cst_27 = arith.constant dense<0.000000e+00> : vector<8x8xf32>
    %24 = tpu.matmul %5, %23, %cst_27 {dimension_numbers = #tpu.dot_dimension_numbers<[1], [0], [0], [1], [0, 0, 1, 1], [], []>} : vector<8x32xf32>, vector<32x8xf32>, vector<8x8xf32> -> vector<8x8xf32>
    %c0_28 = arith.constant 0 : index
    %c0_29 = arith.constant 0 : index
    %c0_30 = arith.constant 0 : index
    %25 = vector.load %arg12[%c0_28, %c0_29, %c0_30] : memref<1x1x8xf32, #tpu.memory_space<vmem>>, vector<1x1x8xf32>
    %26 = vector.shape_cast %25 : vector<1x1x8xf32> to vector<1x8xf32>
    %27 = vector.broadcast %26 : vector<1x8xf32> to vector<8x8xf32>
    %28 = arith.addf %24, %27 : vector<8x8xf32>
    %cst_31 = arith.constant dense<0.000000e+00> : vector<8x8xf32>
    %29 = tpu.matmul %14, %21, %cst_31 {dimension_numbers = #tpu.dot_dimension_numbers<[1], [1], [0], [0], [0, 0, 1, 0], [], []>} : vector<8x8xf32>, vector<8x8xf32>, vector<8x8xf32> -> vector<8x8xf32>
    %30 = vector.broadcast %7 : vector<1x8xf32> to vector<8x8xf32>
    %31 = arith.addf %29, %30 : vector<8x8xf32>
    %cst_32 = arith.constant dense<0xFF800000> : vector<8xf32>
    %32 = vector.multi_reduction <maximumf>, %31, %cst_32 [1] : vector<8x8xf32> to vector<8xf32>
    %33 = vector.shape_cast %32 : vector<8xf32> to vector<8x1xf32>
    %34 = vector.broadcast %33 : vector<8x1xf32> to vector<8x8xf32>
    %35 = arith.subf %31, %34 : vector<8x8xf32>
    %36 = math.exp %35 : vector<8x8xf32>
    %cst_33 = arith.constant dense<0.000000e+00> : vector<8xf32>
    %37 = vector.multi_reduction <add>, %36, %cst_33 [1] : vector<8x8xf32> to vector<8xf32>
    %38 = vector.shape_cast %37 : vector<8xf32> to vector<8x1xf32>
    %39 = tpu.reciprocal %38 {approx = true} : vector<8x1xf32> -> vector<8x1xf32>
    %40 = vector.broadcast %39 : vector<8x1xf32> to vector<8x8xf32>
    %41 = arith.mulf %36, %40 : vector<8x8xf32>
    %cst_34 = arith.constant dense<0.000000e+00> : vector<8x8xf32>
    %42 = tpu.matmul %41, %28, %cst_34 {dimension_numbers = #tpu.dot_dimension_numbers<[1], [0], [0], [1], [0, 0, 1, 1], [], []>} : vector<8x8xf32>, vector<8x8xf32>, vector<8x8xf32> -> vector<8x8xf32>
    %c0_35 = arith.constant 0 : index
    %c0_36 = arith.constant 0 : index
    %c0_37 = arith.constant 0 : index
    %43 = vector.load %arg13[%c0_35, %c0_36, %c0_37] : memref<1x8x32xf32, #tpu.memory_space<vmem>>, vector<1x8x32xf32>
    %44 = vector.shape_cast %43 : vector<1x8x32xf32> to vector<8x32xf32>
    %cst_38 = arith.constant dense<0.000000e+00> : vector<8x32xf32>
    %45 = tpu.matmul %42, %44, %cst_38 {dimension_numbers = #tpu.dot_dimension_numbers<[1], [0], [0], [1], [0, 0, 1, 1], [], []>} : vector<8x8xf32>, vector<8x32xf32>, vector<8x32xf32> -> vector<8x32xf32>
    %c0_i32 = arith.constant 0 : i32
    %46 = arith.cmpi eq, %arg2, %c0_i32 : i32
    %47 = arith.extui %46 : i1 to i32
    %c0_i32_39 = arith.constant 0 : i32
    %48 = arith.cmpi ne, %47, %c0_i32_39 : i32
    scf.if %48 {
      %cst_45 = arith.constant 0.000000e+00 : f32
      %55 = vector.broadcast %cst_45 : f32 to vector<8x32xf32>
      %c0_46 = arith.constant 0 : index
      %c0_47 = arith.constant 0 : index
      %56 = vector.load %arg16[%c0_46, %c0_47] : memref<8x32xf32, #tpu.memory_space<vmem>>, vector<8x32xf32>
      tpu.vector_store %arg16[%c0_46, %c0_47], %55 {strides = array<i32>} : memref<8x32xf32, #tpu.memory_space<vmem>>, vector<8x32xf32>,
    } else {
    }
    %c0_40 = arith.constant 0 : index
    %c0_41 = arith.constant 0 : index
    %49 = vector.load %arg16[%c0_40, %c0_41] : memref<8x32xf32, #tpu.memory_space<vmem>>, vector<8x32xf32>
    %50 = arith.addf %49, %45 : vector<8x32xf32>
    %c0_42 = arith.constant 0 : index
    %c0_43 = arith.constant 0 : index
    %51 = vector.load %arg16[%c0_42, %c0_43] : memref<8x32xf32, #tpu.memory_space<vmem>>, vector<8x32xf32>
    tpu.vector_store %arg16[%c0_42, %c0_43], %50 {strides = array<i32>} : memref<8x32xf32, #tpu.memory_space<vmem>>, vector<8x32xf32>,
    %c3_i32 = arith.constant 3 : i32
    %52 = arith.cmpi eq, %arg2, %c3_i32 : i32
    %53 = arith.extui %52 : i1 to i32
    %c0_i32_44 = arith.constant 0 : i32
    %54 = arith.cmpi ne, %53, %c0_i32_44 : i32
    scf.if %54 {
      %c0_45 = arith.constant 0 : index
      %c0_46 = arith.constant 0 : index
      %55 = vector.load %arg16[%c0_45, %c0_46] : memref<8x32xf32, #tpu.memory_space<vmem>>, vector<8x32xf32>
      %c0_47 = arith.constant 0 : index
      %c0_48 = arith.constant 0 : index
      %56 = vector.load %arg14[%c0_47, %c0_48] : memref<1x32xf32, #tpu.memory_space<vmem>>, vector<1x32xf32>
      %57 = vector.broadcast %56 : vector<1x32xf32> to vector<8x32xf32>
      %58 = arith.addf %55, %57 : vector<8x32xf32>
      %c0_49 = arith.constant 0 : index
      %c0_50 = arith.constant 0 : index
      %c0_51 = arith.constant 0 : index
      %59 = vector.load %arg15[%c0_49, %c0_50, %c0_51] : memref<1x8x32xf32, #tpu.memory_space<vmem>>, vector<1x8x32xf32>
      %60 = vector.shape_cast %59 : vector<1x8x32xf32> to vector<8x32xf32>
      %61 = vector.shape_cast %58 : vector<8x32xf32> to vector<1x8x32xf32>
      tpu.vector_store %arg15[%c0_49, %c0_50, %c0_51], %61 {strides = array<i32>} : memref<1x8x32xf32, #tpu.memory_space<vmem>>, vector<1x8x32xf32>,
    } else {
    }
    return
  }
  func.func @transform_0(%arg0: i32, %arg1: i32, %arg2: i32) -> (i32, i32, i32) {
    %c0_i32 = arith.constant 0 : i32
    %c0_i32_0 = arith.constant 0 : i32
    return %arg0, %arg1, %c0_i32 : i32, i32, i32
  }
  func.func @transform_1(%arg0: i32, %arg1: i32, %arg2: i32) -> (i32, i32, i32) {
    %c0_i32 = arith.constant 0 : i32
    %c0_i32_0 = arith.constant 0 : i32
    %c0_i32_1 = arith.constant 0 : i32
    return %arg0, %c0_i32, %c0_i32_0 : i32, i32, i32
  }
  func.func @transform_2(%arg0: i32, %arg1: i32, %arg2: i32) -> (i32, i32, i32) {
    %c0_i32 = arith.constant 0 : i32
    %c0_i32_0 = arith.constant 0 : i32
    %c0_i32_1 = arith.constant 0 : i32
    return %arg0, %c0_i32, %c0_i32_0 : i32, i32, i32
  }
  func.func @transform_3(%arg0: i32, %arg1: i32, %arg2: i32) -> (i32, i32, i32) {
    %c0_i32 = arith.constant 0 : i32
    %c0_i32_0 = arith.constant 0 : i32
    %c0_i32_1 = arith.constant 0 : i32
    return %arg0, %c0_i32, %c0_i32_0 : i32, i32, i32
  }
  func.func @transform_4(%arg0: i32, %arg1: i32, %arg2: i32) -> (i32, i32, i32) {
    %c0_i32 = arith.constant 0 : i32
    %c0_i32_0 = arith.constant 0 : i32
    %c0_i32_1 = arith.constant 0 : i32
    return %arg2, %c0_i32, %c0_i32_0 : i32, i32, i32
  }
  func.func @transform_5(%arg0: i32, %arg1: i32, %arg2: i32) -> (i32, i32, i32) {
    %c0_i32 = arith.constant 0 : i32
    %c0_i32_0 = arith.constant 0 : i32
    %c0_i32_1 = arith.constant 0 : i32
    return %arg2, %c0_i32, %c0_i32_0 : i32, i32, i32
  }
  func.func @transform_6(%arg0: i32, %arg1: i32, %arg2: i32) -> (i32, i32, i32) {
    %c0_i32 = arith.constant 0 : i32
    %c0_i32_0 = arith.constant 0 : i32
    %c0_i32_1 = arith.constant 0 : i32
    return %arg2, %c0_i32, %c0_i32_0 : i32, i32, i32
  }
  func.func @transform_7(%arg0: i32, %arg1: i32, %arg2: i32) -> (i32, i32, i32) {
    %c0_i32 = arith.constant 0 : i32
    %c0_i32_0 = arith.constant 0 : i32
    %c0_i32_1 = arith.constant 0 : i32
    return %arg2, %c0_i32, %c0_i32_0 : i32, i32, i32
  }
  func.func @transform_8(%arg0: i32, %arg1: i32, %arg2: i32) -> (i32, i32, i32) {
    %c0_i32 = arith.constant 0 : i32
    %c0_i32_0 = arith.constant 0 : i32
    %c0_i32_1 = arith.constant 0 : i32
    return %arg2, %c0_i32, %c0_i32_0 : i32, i32, i32
  }
  func.func @transform_9(%arg0: i32, %arg1: i32, %arg2: i32) -> (i32, i32, i32) {
    %c0_i32 = arith.constant 0 : i32
    %c0_i32_0 = arith.constant 0 : i32
    %c0_i32_1 = arith.constant 0 : i32
    return %arg2, %c0_i32, %c0_i32_0 : i32, i32, i32
  }
  func.func @transform_10(%arg0: i32, %arg1: i32, %arg2: i32) -> (i32, i32, i32) {
    %c0_i32 = arith.constant 0 : i32
    %c0_i32_0 = arith.constant 0 : i32
    %c0_i32_1 = arith.constant 0 : i32
    return %arg2, %c0_i32, %c0_i32_0 : i32, i32, i32
  }
  func.func @transform_11(%arg0: i32, %arg1: i32, %arg2: i32) -> (i32, i32) {
    %c0_i32 = arith.constant 0 : i32
    %c0_i32_0 = arith.constant 0 : i32
    %c0_i32_1 = arith.constant 0 : i32
    return %c0_i32, %c0_i32_0 : i32, i32
  }
  func.func @transform_12(%arg0: i32, %arg1: i32, %arg2: i32) -> (i32, i32, i32) {
    %c0_i32 = arith.constant 0 : i32
    %c0_i32_0 = arith.constant 0 : i32
    return %arg0, %arg1, %c0_i32 : i32, i32, i32
  }
}

</mosaic_0001>

<llo_original>
// kernel: tpu_custom_call.1
$region0: #{tpu_custom_call.1}
  #allocation0 [shape = 'u32[]', space=smem, size = 0x4, offset = 0x4, fixed_abs, tag = 'smem constant byte address 0x4 - core index']
  #allocation1 [shape = 'u32[72,128]{1,0:T(1,128)}', space=vmem, size = 0x9000, scoped, tag = 'internal scratch']
  #allocation2 [shape = 'f32[8,32]{1,0:T(8,128)}', space=vmem, size = 0x1000, scoped, tag = 'scratch operand']
  %s0 = inlined_call_operand.vmem [shape: f32[2,8,32], index: 0, kind: input, shape index: {}]
  %s1 = inlined_call_operand.vmem [shape: f32[2,8,32], index: 1, kind: input, shape index: {}]
  %s2 = inlined_call_operand.vmem [shape: f32[2,8,32], index: 2, kind: input, shape index: {}]
  %s3 = inlined_call_operand.vmem [shape: f32[2,1,8], index: 3, kind: input, shape index: {}]
  %s4 = inlined_call_operand.vmem [shape: f32[4,32,8], index: 4, kind: input, shape index: {}]
  %s5 = inlined_call_operand.vmem [shape: f32[4,1,8], index: 5, kind: input, shape index: {}]
  %s6 = inlined_call_operand.vmem [shape: f32[4,32,8], index: 6, kind: input, shape index: {}]
  %s7 = inlined_call_operand.vmem [shape: f32[4,1,8], index: 7, kind: input, shape index: {}]
  %s8 = inlined_call_operand.vmem [shape: f32[4,32,8], index: 8, kind: input, shape index: {}]
  %s9 = inlined_call_operand.vmem [shape: f32[4,1,8], index: 9, kind: input, shape index: {}]
  %s10 = inlined_call_operand.vmem [shape: f32[4,8,32], index: 10, kind: input, shape index: {}]
  %s11 = inlined_call_operand.vmem [shape: f32[1,32], index: 11, kind: input, shape index: {}]
  %s12 = inlined_call_operand.hbm [shape: f32[2,8,32], index: 12, kind: output, shape index: {}]
  %s13 = sld [smem:[#allocation0]]
  $region89: #{tpu_custom_call.1} parent=0
    _
  %s15 = ssub.s32 1, %s13
  %s16 = scalar_select 0, %s15, %s13
  $region1: #{tpu_custom_call.1} parent=0
    #allocation3 [shape = 'u8[8192]{0}', space=vmem, size = 0x2000, scoped, tag = 'output window, operand 0']
    #allocation4 [shape = 's32[2]{0}', space=sflag, size = 0x8, scoped, tag = 'scoped memory for tpu_custom_call.1']
    %17 = vsyncpa [#allocation4], 0
    %s18 = scalar_lea.sflag [#allocation4], 1
    %19 = vsyncpa %s18, 0
    loop: start=0, step=1, limit=10
    $region2: #{tpu_custom_call.1} parent=1 // loop_pre_header
      _
    $region3: #{tpu_custom_call.1} parent=1 // loop_header
      %s21 = sphi 0, %s25
      %p22 = scmp.ge.s32.totalorder %s21, 10
      %s28 = sphi 0, %s47
      %s29 = sphi 0, %s43
      %s30 = sphi 0, %s39
      %s31 = sphi 0, %s28
      %s32 = sphi 0, %s29
      %s33 = sphi 0, %s30
      %s34 = sphi 0, %s31
      %s35 = sphi 0, %s32
      %s36 = sphi 0, %s33
      %s52 = sphi 0, %s54
      %s55 = sphi 0, %s52
      %s56 = sphi 0, %s55
      %s72 = sphi 0, %s56
      %s78 = sphi 0, %s80
      %s81 = sphi 0, %s78
      %s82 = sphi 0, %s81
      %s98 = sphi 0, %s82
      %s104 = sphi 0, %s106
      %s107 = sphi 0, %s104
      %s108 = sphi 0, %s107
      %s124 = sphi 0, %s108
      %s130 = sphi 0, %s132
      %s133 = sphi 0, %s130
      %s134 = sphi 0, %s133
      %s150 = sphi 0, %s134
      %s156 = sphi 0, %s158
      %s159 = sphi 0, %s156
      %s160 = sphi 0, %s159
      %s176 = sphi 0, %s160
      %s182 = sphi 0, %s184
      %s185 = sphi 0, %s182
      %s186 = sphi 0, %s185
      %s202 = sphi 0, %s186
      %s208 = sphi 0, %s210
      %s211 = sphi 0, %s208
      %s212 = sphi 0, %s211
      %s228 = sphi 0, %s212
      %s234 = sphi 0, %s236
      %s237 = sphi 0, %s234
      %s238 = sphi 0, %s237
      %s254 = sphi 0, %s238
      %s260 = sphi 0, %s262
      %s263 = sphi 0, %s260
      %s264 = sphi 0, %s263
      %s280 = sphi 0, %s264
      %s286 = sphi 0, %s288
      %s289 = sphi 0, %s286
      %s290 = sphi 0, %s289
      %s306 = sphi 0, %s290
      %s312 = sphi 0, %s314
      %s315 = sphi 0, %s312
      %s316 = sphi 0, %s315
      %s332 = sphi 0, %s316
      %s336 = sphi 0, %s336
      %s338 = sphi 0, %s336
      %s339 = sphi 0, %s338
      %s353 = sphi 0, %s339
      %s361 = sphi 0, %s363
      %s364 = sphi 0, %s361
      %s365 = sphi 0, %s364
      %s381 = sphi 0, %s365
    $region4: #{tpu_custom_call.1} parent=1 // loop_header_branch
      %24 = sbr.rel (%p22) target = $region8
    $region5: #{tpu_custom_call.1} parent=1 // loop_body
      %s26 = ssub.s32 %s21, 1
      %s27 = ssub.s32 %s21, 2
      %s37 = sadd.s32 1, %s30
      %p38 = scmp.ge.s32.totalorder %s37, 4
      %s39 = scalar_select %p38, 0, %s37
      %s40 = sadd.s32 1, %s29
      %s41 = scalar_select %p38, %s40, %s29
      %p42 = scmp.ge.s32.totalorder %s41, 1
      %s43 = scalar_select %p42, 0, %s41
      %s44 = sadd.s32 1, %s28
      %s45 = scalar_select %p42, %s44, %s28
      %p46 = scmp.ge.s32.totalorder %s45, 2
      %s47 = scalar_select %p46, 0, %s45
      %s48 = ssub.s32 %s28, %s47
      %s49 = ssub.s32 %s29, %s43
      %s50 = sor.u32 %s48, %s49
      %p51 = scmp.eq.s32.totalorder %s50, 0
      %s53 = sadd.s32 %s52, 1
      %s54 = scalar_select %p51, %s52, %s53
      %p57 = pneg %p51
      %p58 = scmp.eq.s32.totalorder %s21, 7
      %p59 = por %p57, %p58
      %p60 = scmp.ne.s32.totalorder %s52, %s55
      %p61 = scmp.eq.s32.totalorder %s21, 0
      %p62 = por %p60, %p61
      %p63 = scmp.ne.s32.totalorder %s52, %s55
      %p64 = scmp.eq.s32.totalorder %s26, 7
      %p65 = por %p63, %p64
      %p66 = scmp.ne.s32.totalorder %s55, %s56
      %p67 = scmp.eq.s32.totalorder %s26, 0
      %p68 = por %p66, %p67
      %p69 = scmp.ne.s32.totalorder %s55, %s56
      %p70 = scmp.eq.s32.totalorder %s27, 7
      %p71 = por %p69, %p70
      %p73 = scmp.ne.s32.totalorder %s56, %s72
      %p74 = scmp.eq.s32.totalorder %s27, 0
      %p75 = por %p73, %p74
      %s76 = ssub.s32 %s28, %s47
      %p77 = scmp.eq.s32.totalorder %s76, 0
      %s79 = sadd.s32 %s78, 1
      %s80 = scalar_select %p77, %s78, %s79
      %p83 = pneg %p77
      %p84 = scmp.eq.s32.totalorder %s21, 7
      %p85 = por %p83, %p84
      %p86 = scmp.ne.s32.totalorder %s78, %s81
      %p87 = scmp.eq.s32.totalorder %s21, 0
      %p88 = por %p86, %p87
      %p89 = scmp.ne.s32.totalorder %s78, %s81
      %p90 = scmp.eq.s32.totalorder %s26, 7
      %p91 = por %p89, %p90
      %p92 = scmp.ne.s32.totalorder %s81, %s82
      %p93 = scmp.eq.s32.totalorder %s26, 0
      %p94 = por %p92, %p93
      %p95 = scmp.ne.s32.totalorder %s81, %s82
      %p96 = scmp.eq.s32.totalorder %s27, 7
      %p97 = por %p95, %p96
      %p99 = scmp.ne.s32.totalorder %s82, %s98
      %p100 = scmp.eq.s32.totalorder %s27, 0
      %p101 = por %p99, %p100
      %s102 = ssub.s32 %s28, %s47
      %p103 = scmp.eq.s32.totalorder %s102, 0
      %s105 = sadd.s32 %s104, 1
      %s106 = scalar_select %p103, %s104, %s105
      %p109 = pneg %p103
      %p110 = scmp.eq.s32.totalorder %s21, 7
      %p111 = por %p109, %p110
      %p112 = scmp.ne.s32.totalorder %s104, %s107
      %p113 = scmp.eq.s32.totalorder %s21, 0
      %p114 = por %p112, %p113
      %p115 = scmp.ne.s32.totalorder %s104, %s107
      %p116 = scmp.eq.s32.totalorder %s26, 7
      %p117 = por %p115, %p116
      %p118 = scmp.ne.s32.totalorder %s107, %s108
      %p119 = scmp.eq.s32.totalorder %s26, 0
      %p120 = por %p118, %p119
      %p121 = scmp.ne.s32.totalorder %s107, %s108
      %p122 = scmp.eq.s32.totalorder %s27, 7
      %p123 = por %p121, %p122
      %p125 = scmp.ne.s32.totalorder %s108, %s124
      %p126 = scmp.eq.s32.totalorder %s27, 0
      %p127 = por %p125, %p126
      %s128 = ssub.s32 %s28, %s47
      %p129 = scmp.eq.s32.totalorder %s128, 0
      %s131 = sadd.s32 %s130, 1
      %s132 = scalar_select %p129, %s130, %s131
      %p135 = pneg %p129
      %p136 = scmp.eq.s32.totalorder %s21, 7
      %p137 = por %p135, %p136
      %p138 = scmp.ne.s32.totalorder %s130, %s133
      %p139 = scmp.eq.s32.totalorder %s21, 0
      %p140 = por %p138, %p139
      %p141 = scmp.ne.s32.totalorder %s130, %s133
      %p142 = scmp.eq.s32.totalorder %s26, 7
      %p143 = por %p141, %p142
      %p144 = scmp.ne.s32.totalorder %s133, %s134
      %p145 = scmp.eq.s32.totalorder %s26, 0
      %p146 = por %p144, %p145
      %p147 = scmp.ne.s32.totalorder %s133, %s134
      %p148 = scmp.eq.s32.totalorder %s27, 7
      %p149 = por %p147, %p148
      %p151 = scmp.ne.s32.totalorder %s134, %s150
      %p152 = scmp.eq.s32.totalorder %s27, 0
      %p153 = por %p151, %p152
      %s154 = ssub.s32 %s30, %s39
      %p155 = scmp.eq.s32.totalorder %s154, 0
      %s157 = sadd.s32 %s156, 1
      %s158 = scalar_select %p155, %s156, %s157
      %p161 = pneg %p155
      %p162 = scmp.eq.s32.totalorder %s21, 7
      %p163 = por %p161, %p162
      %p164 = scmp.ne.s32.totalorder %s156, %s159
      %p165 = scmp.eq.s32.totalorder %s21, 0
      %p166 = por %p164, %p165
      %p167 = scmp.ne.s32.totalorder %s156, %s159
      %p168 = scmp.eq.s32.totalorder %s26, 7
      %p169 = por %p167, %p168
      %p170 = scmp.ne.s32.totalorder %s159, %s160
      %p171 = scmp.eq.s32.totalorder %s26, 0
      %p172 = por %p170, %p171
      %p173 = scmp.ne.s32.totalorder %s159, %s160
      %p174 = scmp.eq.s32.totalorder %s27, 7
      %p175 = por %p173, %p174
      %p177 = scmp.ne.s32.totalorder %s160, %s176
      %p178 = scmp.eq.s32.totalorder %s27, 0
      %p179 = por %p177, %p178
      %s180 = ssub.s32 %s30, %s39
      %p181 = scmp.eq.s32.totalorder %s180, 0
      %s183 = sadd.s32 %s182, 1
      %s184 = scalar_select %p181, %s182, %s183
      %p187 = pneg %p181
      %p188 = scmp.eq.s32.totalorder %s21, 7
      %p189 = por %p187, %p188
      %p190 = scmp.ne.s32.totalorder %s182, %s185
      %p191 = scmp.eq.s32.totalorder %s21, 0
      %p192 = por %p190, %p191
      %p193 = scmp.ne.s32.totalorder %s182, %s185
      %p194 = scmp.eq.s32.totalorder %s26, 7
      %p195 = por %p193, %p194
      %p196 = scmp.ne.s32.totalorder %s185, %s186
      %p197 = scmp.eq.s32.totalorder %s26, 0
      %p198 = por %p196, %p197
      %p199 = scmp.ne.s32.totalorder %s185, %s186
      %p200 = scmp.eq.s32.totalorder %s27, 7
      %p201 = por %p199, %p200
      %p203 = scmp.ne.s32.totalorder %s186, %s202
      %p204 = scmp.eq.s32.totalorder %s27, 0
      %p205 = por %p203, %p204
      %s206 = ssub.s32 %s30, %s39
      %p207 = scmp.eq.s32.totalorder %s206, 0
      %s209 = sadd.s32 %s208, 1
      %s210 = scalar_select %p207, %s208, %s209
      %p213 = pneg %p207
      %p214 = scmp.eq.s32.totalorder %s21, 7
      %p215 = por %p213, %p214
      %p216 = scmp.ne.s32.totalorder %s208, %s211
      %p217 = scmp.eq.s32.totalorder %s21, 0
      %p218 = por %p216, %p217
      %p219 = scmp.ne.s32.totalorder %s208, %s211
      %p220 = scmp.eq.s32.totalorder %s26, 7
      %p221 = por %p219, %p220
      %p222 = scmp.ne.s32.totalorder %s211, %s212
      %p223 = scmp.eq.s32.totalorder %s26, 0
      %p224 = por %p222, %p223
      %p225 = scmp.ne.s32.totalorder %s211, %s212
      %p226 = scmp.eq.s32.totalorder %s27, 7
      %p227 = por %p225, %p226
      %p229 = scmp.ne.s32.totalorder %s212, %s228
      %p230 = scmp.eq.s32.totalorder %s27, 0
      %p231 = por %p229, %p230
      %s232 = ssub.s32 %s30, %s39
      %p233 = scmp.eq.s32.totalorder %s232, 0
      %s235 = sadd.s32 %s234, 1
      %s236 = scalar_select %p233, %s234, %s235
      %p239 = pneg %p233
      %p240 = scmp.eq.s32.totalorder %s21, 7
      %p241 = por %p239, %p240
      %p242 = scmp.ne.s32.totalorder %s234, %s237
      %p243 = scmp.eq.s32.totalorder %s21, 0
      %p244 = por %p242, %p243
      %p245 = scmp.ne.s32.totalorder %s234, %s237
      %p246 = scmp.eq.s32.totalorder %s26, 7
      %p247 = por %p245, %p246
      %p248 = scmp.ne.s32.totalorder %s237, %s238
      %p249 = scmp.eq.s32.totalorder %s26, 0
      %p250 = por %p248, %p249
      %p251 = scmp.ne.s32.totalorder %s237, %s238
      %p252 = scmp.eq.s32.totalorder %s27, 7
      %p253 = por %p251, %p252
      %p255 = scmp.ne.s32.totalorder %s238, %s254
      %p256 = scmp.eq.s32.totalorder %s27, 0
      %p257 = por %p255, %p256
      %s258 = ssub.s32 %s30, %s39
      %p259 = scmp.eq.s32.totalorder %s258, 0
      %s261 = sadd.s32 %s260, 1
      %s262 = scalar_select %p259, %s260, %s261
      %p265 = pneg %p259
      %p266 = scmp.eq.s32.totalorder %s21, 7
      %p267 = por %p265, %p266
      %p268 = scmp.ne.s32.totalorder %s260, %s263
      %p269 = scmp.eq.s32.totalorder %s21, 0
      %p270 = por %p268, %p269
      %p271 = scmp.ne.s32.totalorder %s260, %s263
      %p272 = scmp.eq.s32.totalorder %s26, 7
      %p273 = por %p271, %p272
      %p274 = scmp.ne.s32.totalorder %s263, %s264
      %p275 = scmp.eq.s32.totalorder %s26, 0
      %p276 = por %p274, %p275
      %p277 = scmp.ne.s32.totalorder %s263, %s264
      %p278 = scmp.eq.s32.totalorder %s27, 7
      %p279 = por %p277, %p278
      %p281 = scmp.ne.s32.totalorder %s264, %s280
      %p282 = scmp.eq.s32.totalorder %s27, 0
      %p283 = por %p281, %p282
      %s284 = ssub.s32 %s30, %s39
      %p285 = scmp.eq.s32.totalorder %s284, 0
      %s287 = sadd.s32 %s286, 1
      %s288 = scalar_select %p285, %s286, %s287
      %p291 = pneg %p285
      %p292 = scmp.eq.s32.totalorder %s21, 7
      %p293 = por %p291, %p292
      %p294 = scmp.ne.s32.totalorder %s286, %s289
      %p295 = scmp.eq.s32.totalorder %s21, 0
      %p296 = por %p294, %p295
      %p297 = scmp.ne.s32.totalorder %s286, %s289
      %p298 = scmp.eq.s32.totalorder %s26, 7
      %p299 = por %p297, %p298
      %p300 = scmp.ne.s32.totalorder %s289, %s290
      %p301 = scmp.eq.s32.totalorder %s26, 0
      %p302 = por %p300, %p301
      %p303 = scmp.ne.s32.totalorder %s289, %s290
      %p304 = scmp.eq.s32.totalorder %s27, 7
      %p305 = por %p303, %p304
      %p307 = scmp.ne.s32.totalorder %s290, %s306
      %p308 = scmp.eq.s32.totalorder %s27, 0
      %p309 = por %p307, %p308
      %s310 = ssub.s32 %s30, %s39
      %p311 = scmp.eq.s32.totalorder %s310, 0
      %s313 = sadd.s32 %s312, 1
      %s314 = scalar_select %p311, %s312, %s313
      %p317 = pneg %p311
      %p318 = scmp.eq.s32.totalorder %s21, 7
      %p319 = por %p317, %p318
      %p320 = scmp.ne.s32.totalorder %s312, %s315
      %p321 = scmp.eq.s32.totalorder %s21, 0
      %p322 = por %p320, %p321
      %p323 = scmp.ne.s32.totalorder %s312, %s315
      %p324 = scmp.eq.s32.totalorder %s26, 7
      %p325 = por %p323, %p324
      %p326 = scmp.ne.s32.totalorder %s315, %s316
      %p327 = scmp.eq.s32.totalorder %s26, 0
      %p328 = por %p326, %p327
      %p329 = scmp.ne.s32.totalorder %s315, %s316
      %p330 = scmp.eq.s32.totalorder %s27, 7
      %p331 = por %p329, %p330
      %p333 = scmp.ne.s32.totalorder %s316, %s332
      %p334 = scmp.eq.s32.totalorder %s27, 0
      %p335 = por %p333, %p334
      %s337 = sadd.s32 %s336, 1
      %p340 = scmp.eq.s32.totalorder %s21, 7
      %p341 = scmp.ne.s32.totalorder %s336, %s338
      %p342 = scmp.eq.s32.totalorder %s21, 0
      %p343 = por %p341, %p342
      %p344 = scmp.ne.s32.totalorder %s336, %s338
      %p345 = scmp.eq.s32.totalorder %s26, 7
      %p346 = por %p344, %p345
      %p347 = scmp.ne.s32.totalorder %s338, %s339
      %p348 = scmp.eq.s32.totalorder %s26, 0
      %p349 = por %p347, %p348
      %p350 = scmp.ne.s32.totalorder %s338, %s339
      %p351 = scmp.eq.s32.totalorder %s27, 7
      %p352 = por %p350, %p351
      %p354 = scmp.ne.s32.totalorder %s339, %s353
      %p355 = scmp.eq.s32.totalorder %s27, 0
      %p356 = por %p354, %p355
      %s357 = ssub.s32 %s28, %s47
      %s358 = ssub.s32 %s29, %s43
      %s359 = sor.u32 %s357, %s358
      %p360 = scmp.eq.s32.totalorder %s359, 0
      %s362 = sadd.s32 %s361, 1
      %s363 = scalar_select %p360, %s361, %s362
      %p366 = pneg %p360
      %p367 = scmp.eq.s32.totalorder %s21, 7
      %p368 = por %p366, %p367
      %p369 = scmp.ne.s32.totalorder %s361, %s364
      %p370 = scmp.eq.s32.totalorder %s21, 0
      %p371 = por %p369, %p370
      %p372 = scmp.ne.s32.totalorder %s361, %s364
      %p373 = scmp.eq.s32.totalorder %s26, 7
      %p374 = por %p372, %p373
      %p375 = scmp.ne.s32.totalorder %s364, %s365
      %p376 = scmp.eq.s32.totalorder %s26, 0
      %p377 = por %p375, %p376
      %p378 = scmp.ne.s32.totalorder %s364, %s365
      %p379 = scmp.eq.s32.totalorder %s27, 7
      %p380 = por %p378, %p379
      %p382 = scmp.ne.s32.totalorder %s365, %s381
      %p383 = scmp.eq.s32.totalorder %s27, 0
      %p384 = por %p382, %p383
      %p385 = scmp.le.s32.totalorder 1, %s21
      %p386 = scmp.lt.s32.totalorder %s21, 9
      %p387 = pnand %p385, %p386
      %p388 = pneg %p387
      // Predicated region
      $region9: #{tpu_custom_call.1} parent=5 // pred_check
        _
      $region10: #{tpu_custom_call.1} parent=5 // pred_check_branch
        %390 = sbr.rel (%p387) target = $region12
      $region11: #{tpu_custom_call.1} parent=5 // pred_region
        %s391 = ssub.s32 %s21, 1
        // Predicated region
        $region13: #{tpu_custom_call.1} parent=11 // pred_check
          %p392 = pneg %p349
        $region14: #{tpu_custom_call.1} parent=11 // pred_check_branch
          %394 = sbr.rel (%p392) target = $region16
        $region15: #{tpu_custom_call.1} parent=11 // pred_region
          _
        $region16: #{tpu_custom_call.1} parent=11 // pred_fallthru
          _
      $region12: #{tpu_custom_call.1} parent=5 // pred_fallthru
        _
      %p395 = scmp.lt.s32.totalorder %s21, 8
      // Predicated region
      $region17: #{tpu_custom_call.1} parent=5 // pred_check
        %p396 = pneg %p395
      $region18: #{tpu_custom_call.1} parent=5 // pred_check_branch
        %398 = sbr.rel (%p396) target = $region20
      $region19: #{tpu_custom_call.1} parent=5 // pred_region
        // Predicated region
        $region21: #{tpu_custom_call.1} parent=19 // pred_check
          %p399 = pneg %p62
        $region22: #{tpu_custom_call.1} parent=19 // pred_check_branch
          %401 = sbr.rel (%p399) target = $region24
        $region23: #{tpu_custom_call.1} parent=19 // pred_region
          %p402 = scmp.lt.s32.totalorder %s28, 1
          %s403 = scalar_select %p402, %s28, 1
          %p404 = scmp.lt.s32.totalorder %s29, 0
          %s405 = scalar_select %p404, %s29, 0
          %s406 = sadd.s32 %s405, %s403
          %s407 = smul.addr %s406, 8
          %s408 = scalar_lea.vmem %s0, %s407
        $region24: #{tpu_custom_call.1} parent=19 // pred_fallthru
          _
        // Predicated region
        $region25: #{tpu_custom_call.1} parent=19 // pred_check
          %p409 = pneg %p88
        $region26: #{tpu_custom_call.1} parent=19 // pred_check_branch
          %411 = sbr.rel (%p409) target = $region28
        $region27: #{tpu_custom_call.1} parent=19 // pred_region
          %p412 = scmp.lt.s32.totalorder %s28, 1
          %s413 = scalar_select %p412, %s28, 1
          %s414 = smul.addr %s413, 8
          %s415 = scalar_lea.vmem %s1, %s414
        $region28: #{tpu_custom_call.1} parent=19 // pred_fallthru
          _
        // Predicated region
        $region29: #{tpu_custom_call.1} parent=19 // pred_check
          %p416 = pneg %p114
        $region30: #{tpu_custom_call.1} parent=19 // pred_check_branch
          %418 = sbr.rel (%p416) target = $region32
        $region31: #{tpu_custom_call.1} parent=19 // pred_region
          %p419 = scmp.lt.s32.totalorder %s28, 1
          %s420 = scalar_select %p419, %s28, 1
          %s421 = smul.addr %s420, 8
          %s422 = scalar_lea.vmem %s2, %s421
        $region32: #{tpu_custom_call.1} parent=19 // pred_fallthru
          _
        // Predicated region
        $region33: #{tpu_custom_call.1} parent=19 // pred_check
          %p423 = pneg %p140
        $region34: #{tpu_custom_call.1} parent=19 // pred_check_branch
          %425 = sbr.rel (%p423) target = $region36
        $region35: #{tpu_custom_call.1} parent=19 // pred_region
          %p426 = scmp.lt.s32.totalorder %s28, 1
          %s427 = scalar_select %p426, %s28, 1
          %s428 = scalar_lea.vmem %s3, %s427
        $region36: #{tpu_custom_call.1} parent=19 // pred_fallthru
          _
        // Predicated region
        $region37: #{tpu_custom_call.1} parent=19 // pred_check
          %p429 = pneg %p166
        $region38: #{tpu_custom_call.1} parent=19 // pred_check_branch
          %431 = sbr.rel (%p429) target = $region40
        $region39: #{tpu_custom_call.1} parent=19 // pred_region
          %p432 = scmp.lt.s32.totalorder %s30, 3
          %s433 = scalar_select %p432, %s30, 3
          %s434 = smul.addr %s433, 4
          %s435 = smul.addr %s434, 8
          %s436 = scalar_lea.vmem %s4, %s435
        $region40: #{tpu_custom_call.1} parent=19 // pred_fallthru
          _
        // Predicated region
        $region41: #{tpu_custom_call.1} parent=19 // pred_check
          %p437 = pneg %p192
        $region42: #{tpu_custom_call.1} parent=19 // pred_check_branch
          %439 = sbr.rel (%p437) target = $region44
        $region43: #{tpu_custom_call.1} parent=19 // pred_region
          %p440 = scmp.lt.s32.totalorder %s30, 3
          %s441 = scalar_select %p440, %s30, 3
          %s442 = scalar_lea.vmem %s5, %s441
        $region44: #{tpu_custom_call.1} parent=19 // pred_fallthru
          _
        // Predicated region
        $region45: #{tpu_custom_call.1} parent=19 // pred_check
          %p443 = pneg %p218
        $region46: #{tpu_custom_call.1} parent=19 // pred_check_branch
          %445 = sbr.rel (%p443) target = $region48
        $region47: #{tpu_custom_call.1} parent=19 // pred_region
          %p446 = scmp.lt.s32.totalorder %s30, 3
          %s447 = scalar_select %p446, %s30, 3
          %s448 = smul.addr %s447, 4
          %s449 = smul.addr %s448, 8
          %s450 = scalar_lea.vmem %s6, %s449
        $region48: #{tpu_custom_call.1} parent=19 // pred_fallthru
          _
        // Predicated region
        $region49: #{tpu_custom_call.1} parent=19 // pred_check
          %p451 = pneg %p244
        $region50: #{tpu_custom_call.1} parent=19 // pred_check_branch
          %453 = sbr.rel (%p451) target = $region52
        $region51: #{tpu_custom_call.1} parent=19 // pred_region
          %p454 = scmp.lt.s32.totalorder %s30, 3
          %s455 = scalar_select %p454, %s30, 3
          %s456 = scalar_lea.vmem %s7, %s455
        $region52: #{tpu_custom_call.1} parent=19 // pred_fallthru
          _
        // Predicated region
        $region53: #{tpu_custom_call.1} parent=19 // pred_check
          %p457 = pneg %p270
        $region54: #{tpu_custom_call.1} parent=19 // pred_check_branch
          %459 = sbr.rel (%p457) target = $region56
        $region55: #{tpu_custom_call.1} parent=19 // pred_region
          %p460 = scmp.lt.s32.totalorder %s30, 3
          %s461 = scalar_select %p460, %s30, 3
          %s462 = smul.addr %s461, 4
          %s463 = smul.addr %s462, 8
          %s464 = scalar_lea.vmem %s8, %s463
        $region56: #{tpu_custom_call.1} parent=19 // pred_fallthru
          _
        // Predicated region
        $region57: #{tpu_custom_call.1} parent=19 // pred_check
          %p465 = pneg %p296
        $region58: #{tpu_custom_call.1} parent=19 // pred_check_branch
          %467 = sbr.rel (%p465) target = $region60
        $region59: #{tpu_custom_call.1} parent=19 // pred_region
          %p468 = scmp.lt.s32.totalorder %s30, 3
          %s469 = scalar_select %p468, %s30, 3
          %s470 = scalar_lea.vmem %s9, %s469
        $region60: #{tpu_custom_call.1} parent=19 // pred_fallthru
          _
        // Predicated region
        $region61: #{tpu_custom_call.1} parent=19 // pred_check
          %p471 = pneg %p322
        $region62: #{tpu_custom_call.1} parent=19 // pred_check_branch
          %473 = sbr.rel (%p471) target = $region64
        $region63: #{tpu_custom_call.1} parent=19 // pred_region
          %p474 = scmp.lt.s32.totalorder %s30, 3
          %s475 = scalar_select %p474, %s30, 3
          %s476 = smul.addr %s475, 8
          %s477 = scalar_lea.vmem %s10, %s476
        $region64: #{tpu_custom_call.1} parent=19 // pred_fallthru
          _
      $region20: #{tpu_custom_call.1} parent=5 // pred_fallthru
        _
      %p478 = scmp.le.s32.totalorder 1, %s21
      %p479 = scmp.lt.s32.totalorder %s21, 9
      %p480 = pnand %p478, %p479
      %p481 = pneg %p480
      // Predicated region
      $region65: #{tpu_custom_call.1} parent=5 // pred_check
        _
      $region66: #{tpu_custom_call.1} parent=5 // pred_check_branch
        %483 = sbr.rel (%p480) target = $region68
      $region67: #{tpu_custom_call.1} parent=5 // pred_region
        %s484 = ssub.s32 %s21, 1
        %p485 = scmp.lt.s32.totalorder %s31, 1
        %s486 = scalar_select %p485, %s31, 1
        %p487 = scmp.lt.s32.totalorder %s32, 0
        %s488 = scalar_select %p487, %s32, 0
        %s489 = sadd.s32 %s488, %s486
        %s490 = smul.addr %s489, 8
        %s491 = scalar_lea.vmem %s0, %s490
        %p492 = pneg %p68
        %p493 = pneg %p65
        %p494 = scmp.lt.s32.totalorder %s31, 1
        %s495 = scalar_select %p494, %s31, 1
        %s496 = smul.addr %s495, 8
        %s497 = scalar_lea.vmem %s1, %s496
        %p498 = pneg %p94
        %p499 = pneg %p91
        %p500 = scmp.lt.s32.totalorder %s31, 1
        %s501 = scalar_select %p500, %s31, 1
        %s502 = smul.addr %s501, 8
        %s503 = scalar_lea.vmem %s2, %s502
        %p504 = pneg %p120
        %p505 = pneg %p117
        %p506 = scmp.lt.s32.totalorder %s31, 1
        %s507 = scalar_select %p506, %s31, 1
        %s508 = scalar_lea.vmem %s3, %s507
        %p509 = pneg %p146
        %p510 = pneg %p143
        %p511 = scmp.lt.s32.totalorder %s33, 3
        %s512 = scalar_select %p511, %s33, 3
        %s513 = smul.addr %s512, 4
        %s514 = smul.addr %s513, 8
        %s515 = scalar_lea.vmem %s4, %s514
        %p516 = pneg %p172
        %p517 = pneg %p169
        %p518 = scmp.lt.s32.totalorder %s33, 3
        %s519 = scalar_select %p518, %s33, 3
        %s520 = scalar_lea.vmem %s5, %s519
        %p521 = pneg %p198
        %p522 = pneg %p195
        %p523 = scmp.lt.s32.totalorder %s33, 3
        %s524 = scalar_select %p523, %s33, 3
        %s525 = smul.addr %s524, 4
        %s526 = smul.addr %s525, 8
        %s527 = scalar_lea.vmem %s6, %s526
        %p528 = pneg %p224
        %p529 = pneg %p221
        %p530 = scmp.lt.s32.totalorder %s33, 3
        %s531 = scalar_select %p530, %s33, 3
        %s532 = scalar_lea.vmem %s7, %s531
        %p533 = pneg %p250
        %p534 = pneg %p247
        %p535 = scmp.lt.s32.totalorder %s33, 3
        %s536 = scalar_select %p535, %s33, 3
        %s537 = smul.addr %s536, 4
        %s538 = smul.addr %s537, 8
        %s539 = scalar_lea.vmem %s8, %s538
        %p540 = pneg %p276
        %p541 = pneg %p273
        %p542 = scmp.lt.s32.totalorder %s33, 3
        %s543 = scalar_select %p542, %s33, 3
        %s544 = scalar_lea.vmem %s9, %s543
        %p545 = pneg %p302
        %p546 = pneg %p299
        %p547 = scmp.lt.s32.totalorder %s33, 3
        %s548 = scalar_select %p547, %s33, 3
        %s549 = smul.addr %s548, 8
        %s550 = scalar_lea.vmem %s10, %s549
        %p551 = pneg %p328
        %p552 = pneg %p325
        %p553 = pneg %p349
        %p554 = pneg %p346
        %p555 = pneg %p377
        %p556 = pneg %p374
        %s557 = sand.u32 %s364, 1
        %s558 = scalar_lea.sflag [#allocation4], %s557
        %s559 = sand.u32 %s364, 1
        %s560 = smul.addr %s559, 8
        %s561 = scalar_lea.vmem [#allocation3], %s560
        %p562 = scmp.lt.s32.totalorder %s31, 1
        %s563 = scalar_select %p562, %s31, 1
        %p564 = scmp.lt.s32.totalorder %s32, 0
        %s565 = scalar_select %p564, %s32, 0
        %s566 = sadd.s32 %s565, %s563
        %s567 = smul.addr %s566, 8
        %s568 = scalar_lea.vmem %s0, %s567
        %p569 = scmp.lt.s32.totalorder %s31, 1
        %s570 = scalar_select %p569, %s31, 1
        %s571 = smul.addr %s570, 8
        %s572 = scalar_lea.vmem %s1, %s571
        %p573 = scmp.lt.s32.totalorder %s31, 1
        %s574 = scalar_select %p573, %s31, 1
        %s575 = smul.addr %s574, 8
        %s576 = scalar_lea.vmem %s2, %s575
        %p577 = scmp.lt.s32.totalorder %s31, 1
        %s578 = scalar_select %p577, %s31, 1
        %s579 = scalar_lea.vmem %s3, %s578
        %p580 = scmp.lt.s32.totalorder %s33, 3
        %s581 = scalar_select %p580, %s33, 3
        %s582 = smul.addr %s581, 4
        %s583 = smul.addr %s582, 8
        %s584 = scalar_lea.vmem %s4, %s583
        %p585 = scmp.lt.s32.totalorder %s33, 3
        %s586 = scalar_select %p585, %s33, 3
        %s587 = scalar_lea.vmem %s5, %s586
        %p588 = scmp.lt.s32.totalorder %s33, 3
        %s589 = scalar_select %p588, %s33, 3
        %s590 = smul.addr %s589, 4
        %s591 = smul.addr %s590, 8
        %s592 = scalar_lea.vmem %s6, %s591
        %p593 = scmp.lt.s32.totalorder %s33, 3
        %s594 = scalar_select %p593, %s33, 3
        %s595 = scalar_lea.vmem %s7, %s594
        %p596 = scmp.lt.s32.totalorder %s33, 3
        %s597 = scalar_select %p596, %s33, 3
        %s598 = smul.addr %s597, 4
        %s599 = smul.addr %s598, 8
        %s600 = scalar_lea.vmem %s8, %s599
        %p601 = scmp.lt.s32.totalorder %s33, 3
        %s602 = scalar_select %p601, %s33, 3
        %s603 = scalar_lea.vmem %s9, %s602
        %p604 = scmp.lt.s32.totalorder %s33, 3
        %s605 = scalar_select %p604, %s33, 3
        %s606 = smul.addr %s605, 8
        %s607 = scalar_lea.vmem %s10, %s606
        %v608 = vld [vmem:[%s568] sm:$0xff]
        %v609 = vld [vmem:[%s572] sm:$0xff]
        %v610 = vld [vmem:[%s576] sm:$0xff]
        %v611 = vld [vmem:[%s579] sm:$0x1]
        %v612 = vld [vmem:[%s584] sm:$0xff]
        %v613 = vld [vmem:[%s584 + $0x8] sm:$0xff]
        %v614 = vld [vmem:[%s584 + $0x10] sm:$0xff]
        %v615 = vld [vmem:[%s584 + $0x18] sm:$0xff]
        %v616 = vld [vmem:[%s587] sm:$0x1]
        %v618 = vperm.slane %v616, 0
        %vm620 = vcmask 261120
        %v622 = vsel %vm620, %v608, 0
        %624 = vmatpush.msra.mxu0 0.0
        %625 = vmatpush.msra.mxu0 0.0
        %626 = vmatpush.msra.mxu0 0.0
        %627 = vmatpush.msra.mxu0 0.0
        %628 = vmatpush.msra.mxu0 0.0
        %629 = vmatpush.msra.mxu0 0.0
        %630 = vmatpush.msra.mxu0 0.0
        %631 = vmatpush.msra.mxu0 0.0
        %632 = vmatpush.msra.mxu0 0.0
        %633 = vmatpush.msra.mxu0 0.0
        %634 = vmatpush.msra.mxu0 0.0
        %635 = vmatpush.msra.mxu0 0.0
        %636 = vmatpush.msra.mxu0 %v615
        %637 = vmatpush.msra.mxu0 %v614
        %638 = vmatpush.msra.mxu0 %v613
        %639 = vmatpush.msra.mxu0 %v612
        %640 = vmatmul.f32.gmra.mxu0 %v622
        %v641 = vpop.f32.mrf.mxu0
        %v642 = vadd.f32 %v618, %v641
        %643 = vdwg.mxu0
        %v644 = vld [vmem:[%s592] sm:$0xff]
        %v645 = vld [vmem:[%s592 + $0x8] sm:$0xff]
        %v646 = vld [vmem:[%s592 + $0x10] sm:$0xff]
        %v647 = vld [vmem:[%s592 + $0x18] sm:$0xff]
        %v648 = vld [vmem:[%s595] sm:$0x1]
        %v650 = vperm.slane %v648, 0
        %v653 = vsel %vm620, %v609, 0
        %655 = vmatpush.msra.mxu0 0.0
        %656 = vmatpush.msra.mxu0 0.0
        %657 = vmatpush.msra.mxu0 0.0
        %658 = vmatpush.msra.mxu0 0.0
        %659 = vmatpush.msra.mxu0 0.0
        %660 = vmatpush.msra.mxu0 0.0
        %661 = vmatpush.msra.mxu0 0.0
        %662 = vmatpush.msra.mxu0 0.0
        %663 = vmatpush.msra.mxu0 0.0
        %664 = vmatpush.msra.mxu0 0.0
        %665 = vmatpush.msra.mxu0 0.0
        %666 = vmatpush.msra.mxu0 0.0
        %667 = vmatpush.msra.mxu0 %v647
        %668 = vmatpush.msra.mxu0 %v646
        %669 = vmatpush.msra.mxu0 %v645
        %670 = vmatpush.msra.mxu0 %v644
        %671 = vmatmul.f32.gmra.mxu0 %v653
        %v672 = vpop.f32.mrf.mxu0
        %v673 = vadd.f32 %v650, %v672
        %674 = vdwg.mxu0
        %v675 = vld [vmem:[%s600] sm:$0xff]
        %v676 = vld [vmem:[%s600 + $0x8] sm:$0xff]
        %v677 = vld [vmem:[%s600 + $0x10] sm:$0xff]
        %v678 = vld [vmem:[%s600 + $0x18] sm:$0xff]
        %v679 = vld [vmem:[%s603] sm:$0x1]
        %v681 = vperm.slane %v679, 0
        %v684 = vsel %vm620, %v610, 0
        %686 = vmatpush.msra.mxu0 0.0
        %687 = vmatpush.msra.mxu0 0.0
        %688 = vmatpush.msra.mxu0 0.0
        %689 = vmatpush.msra.mxu0 0.0
        %690 = vmatpush.msra.mxu0 0.0
        %691 = vmatpush.msra.mxu0 0.0
        %692 = vmatpush.msra.mxu0 0.0
        %693 = vmatpush.msra.mxu0 0.0
        %694 = vmatpush.msra.mxu0 0.0
        %695 = vmatpush.msra.mxu0 0.0
        %696 = vmatpush.msra.mxu0 0.0
        %697 = vmatpush.msra.mxu0 0.0
        %698 = vmatpush.msra.mxu0 %v678
        %699 = vmatpush.msra.mxu0 %v677
        %700 = vmatpush.msra.mxu0 %v676
        %701 = vmatpush.msra.mxu0 %v675
        %702 = vmatmul.f32.gmra.mxu0 %v684
        %v703 = vpop.f32.mrf.mxu0
        %v704 = vadd.f32 %v681, %v703
        %705 = vdwg.mxu0
        %v707 = vperm.slane %v611, 0
        %vm709 = vcmask 64512
        %v711 = vsel %vm709, %v642, 0
        %v714 = vsel %vm709, %v673, 0
        %716 = vmatpush.xpose.msra.mxu0 0.0
        %717 = vmatpush.xpose.msra.mxu0 0.0
        %718 = vmatpush.xpose.msra.mxu0 0.0
        %719 = vmatpush.xpose.msra.mxu0 0.0
        %720 = vmatpush.xpose.msra.mxu0 0.0
        %721 = vmatpush.xpose.msra.mxu0 0.0
        %722 = vmatpush.xpose.msra.mxu0 0.0
        %723 = vmatpush.xpose.msra.mxu0 0.0
        %724 = vmatpush.xpose.msra.mxu0 0.0
        %725 = vmatpush.xpose.msra.mxu0 0.0
        %726 = vmatpush.xpose.msra.mxu0 0.0
        %727 = vmatpush.xpose.msra.mxu0 0.0
        %728 = vmatpush.xpose.msra.mxu0 0.0
        %729 = vmatpush.xpose.msra.mxu0 0.0
        %730 = vmatpush.xpose.msra.mxu0 0.0
        %731 = vmatpush.xpose.msra.mxu0 %v714
        %732 = vmatmul.f32.gmra.mxu0 %v711
        %v733 = vpop.f32.mrf.mxu0
        %v734 = vadd.f32 %v707, %v733
        %735 = vdwg.mxu0
        %v736 = vsel %vm709, %v734, -inf
        %737 = vmax.xlane.f32.xlu0 %v736
        %v738 = vpop.xlane.xlu0 %737
        %v739 = vsub.f32 %v734, %v738
        %v740 = vmul.f32 %v739, 1.442695
        %v741 = vpow.pop %v740
        %v742 = vsel %vm709, %v741, 0.0
        %743 = vadd.xlane.f32.xlu0 %v742
        %v744 = vpop.xlane.xlu0 %743
        %v745 = vrcp.pop %v744
        %v746 = vmul.f32 %v741, %v745
        %v748 = vsel %vm709, %v746, 0
        %750 = vmatpush.msra.mxu0 0.0
        %751 = vmatpush.msra.mxu0 0.0
        %752 = vmatpush.msra.mxu0 0.0
        %753 = vmatpush.msra.mxu0 0.0
        %754 = vmatpush.msra.mxu0 0.0
        %755 = vmatpush.msra.mxu0 0.0
        %756 = vmatpush.msra.mxu0 0.0
        %757 = vmatpush.msra.mxu0 0.0
        %758 = vmatpush.msra.mxu0 0.0
        %759 = vmatpush.msra.mxu0 0.0
        %760 = vmatpush.msra.mxu0 0.0
        %761 = vmatpush.msra.mxu0 0.0
        %762 = vmatpush.msra.mxu0 0.0
        %763 = vmatpush.msra.mxu0 0.0
        %764 = vmatpush.msra.mxu0 0.0
        %765 = vmatpush.msra.mxu0 %v704
        %766 = vmatmul.f32.gmra.mxu0 %v748
        %v767 = vpop.f32.mrf.mxu0
        %v768 = vadd.f32 0.0, %v767
        %769 = vdwg.mxu0
        %v770 = vld [vmem:[%s607] sm:$0xff]
        %v772 = vsel %vm709, %v768, 0
        %774 = vmatpush.msra.mxu0 0.0
        %775 = vmatpush.msra.mxu0 0.0
        %776 = vmatpush.msra.mxu0 0.0
        %777 = vmatpush.msra.mxu0 0.0
        %778 = vmatpush.msra.mxu0 0.0
        %779 = vmatpush.msra.mxu0 0.0
        %780 = vmatpush.msra.mxu0 0.0
        %781 = vmatpush.msra.mxu0 0.0
        %782 = vmatpush.msra.mxu0 0.0
        %783 = vmatpush.msra.mxu0 0.0
        %784 = vmatpush.msra.mxu0 0.0
        %785 = vmatpush.msra.mxu0 0.0
        %786 = vmatpush.msra.mxu0 0.0
        %787 = vmatpush.msra.mxu0 0.0
        %788 = vmatpush.msra.mxu0 0.0
        %789 = vmatpush.msra.mxu0 %v770
        %790 = vmatmul.f32.gmra.mxu0 %v772
        %v791 = vpop.f32.mrf.mxu0
        %v792 = vadd.f32 0.0, %v791
        %793 = vdwg.mxu0
        %p794 = scmp.eq.s32.totalorder %s33, 0
        // Predicated region
        $region69: #{tpu_custom_call.1} parent=67 // pred_check
          %p795 = pneg %p794
        $region70: #{tpu_custom_call.1} parent=67 // pred_check_branch
          %797 = sbr.rel (%p795) target = $region72
        $region71: #{tpu_custom_call.1} parent=67 // pred_region
          %798 = vst.msk [vmem:[#allocation2] sm:$0xff] %vm620, 0.0
        $region72: #{tpu_custom_call.1} parent=67 // pred_fallthru
          _
        %v799 = vld [vmem:[#allocation2] sm:$0xff]
        %v800 = vadd.f32 %v799, %v792
        %801 = vst.msk [vmem:[#allocation2] sm:$0xff] %vm620, %v800
        %p802 = scmp.eq.s32.totalorder %s33, 3
        // Predicated region
        $region73: #{tpu_custom_call.1} parent=67 // pred_check
          %p803 = pneg %p802
        $region74: #{tpu_custom_call.1} parent=67 // pred_check_branch
          %805 = sbr.rel (%p803) target = $region76
        $region75: #{tpu_custom_call.1} parent=67 // pred_region
          %v806 = vld [vmem:[#allocation2] sm:$0xff]
          %v807 = vld [vmem:[%s11] sm:$0x1]
          %v809 = vperm.slane %v807, 0
          %v811 = vadd.f32 %v806, %v809
          %812 = vst.msk [vmem:[%s561] sm:$0xff] %vm620, %v811
        $region76: #{tpu_custom_call.1} parent=67 // pred_fallthru
          _
        %s813 = sand.u32 %s364, 1
        %s814 = scalar_lea.sflag [#allocation4], %s813
        %s815 = sand.u32 %s364, 1
        %s816 = smul.addr %s815, 8
        %s817 = scalar_lea.vmem [#allocation3], %s816
        // Predicated region
        $region77: #{tpu_custom_call.1} parent=67 // pred_check
          %p818 = pneg %p374
        $region78: #{tpu_custom_call.1} parent=67 // pred_check_branch
          %820 = sbr.rel (%p818) target = $region80
        $region79: #{tpu_custom_call.1} parent=67 // pred_region
          %822 = vsyncadd %s814, 0
          %s823 = sadd.s32 %s32, %s31
          %s824 = smul.addr %s823, 8
          %s825 = scalar_lea.hbm %s12, %s824
          %s827 = sshll.u32 %s817, 4
          %s828 = int_to_ptr.vmem [resolvable:$true] %s827
          %s829 = sshll.u32 %s825, 4
          %s830 = int_to_ptr.hbm [resolvable:$true] %s829
          %832 = dma.vmem_to_hbm [thread:$0]  %s828, 128, %s830, %s814
        $region80: #{tpu_custom_call.1} parent=67 // pred_fallthru
          _
      $region68: #{tpu_custom_call.1} parent=5 // pred_fallthru
        _
      %p833 = scmp.le.s32.totalorder 2, %s21
      // Predicated region
      $region81: #{tpu_custom_call.1} parent=5 // pred_check
        %p834 = pneg %p833
      $region82: #{tpu_custom_call.1} parent=5 // pred_check_branch
        %836 = sbr.rel (%p834) target = $region84
      $region83: #{tpu_custom_call.1} parent=5 // pred_region
        %s837 = ssub.s32 %s21, 2
        // Predicated region
        $region85: #{tpu_custom_call.1} parent=83 // pred_check
          %p838 = pneg %p380
        $region86: #{tpu_custom_call.1} parent=83 // pred_check_branch
          %840 = sbr.rel (%p838) target = $region88
        $region87: #{tpu_custom_call.1} parent=83 // pred_region
          %s841 = sand.u32 %s365, 1
          %s842 = scalar_lea.sflag [#allocation4], %s841
          %s843 = sand.u32 %s365, 1
          %s844 = smul.addr %s843, 8
          %s845 = scalar_lea.vmem [#allocation3], %s844
          %847 = dma.done %s842, 128
        $region88: #{tpu_custom_call.1} parent=83 // pred_fallthru
          _
      $region84: #{tpu_custom_call.1} parent=5 // pred_fallthru
        _
    $region6: #{tpu_custom_call.1} parent=1 // loop_footer
      %s25 = sadd.s32 1, %s21
    $region7: #{tpu_custom_call.1} parent=1 // loop_footer_branch
      %20 = sbr.rel target = $region3
    $region8: #{tpu_custom_call.1} parent=1 // loop_exit
      _
    %848 = vsyncpa [#allocation4], 1
    %s849 = scalar_lea.sflag [#allocation4], 1
    %850 = vsyncpa %s849, 1

</llo_original>
